<compile_context>
chip_gen: v5e
topology: v5e:2x2
jax: 0.10.0
libtpu: 0.0.40
codegen_flags: <defaults>
</compile_context>

<pallas_src>
import functools

import jax
import jax.numpy as jnp
import numpy as np
from jax import lax
from jax.experimental import pallas as pl
from jax.experimental.pallas import tpu as pltpu

SELU_ALPHA = 1.6732632423543772
SELU_LAMBDA = 1.0507009873554805


def _tensorcores_per_chip():
    """2 on v7x (2 TCs/chip), 1 on v5e/v6e; default 1 if the query fails."""
    try:
        kind = jax.devices()[0].device_kind.lower()
    except Exception:  # pragma: no cover - defensive
        return 1
    return 2 if "7" in kind else 1


def _residual_conv_bn_selu_kernel(x_ref, w_ref, shift_ref, o_ref, *,
                                  KH, PH, H, W, Cin, Cout, NB):
    """NB batch elements per grid step, fully lane-dense.

    x_ref:     (NB, H + 2*PH, W*Cin)  height-padded input, lane-packed (W,C)->lanes
    w_ref:     (KH, W*Cin, W*Cout)    banded conv weight (kw shift + channel mix +
                                      folded BN scale + folded width padding)
    shift_ref: (1, W*Cout)            folded BN shift, tiled lane-dense
    o_ref:     (NB, H, W*Cout)        output, lane-dense (W*Cout multiple of 128)
    """
    WC_out = W * Cout

    def stack_rows(row0):
        # (NB*H, W*Cin): per-batch H-row window starting at sublane offset row0,
        # batches stacked along the sublane (M) axis.  kh=1,2 offsets cost two
        # cheap sublane rolls per step (XLU slot, off the MXU/VPU critical path).
        if NB == 1:
            return x_ref[0, row0:row0 + H, :]
        return jnp.concatenate(
            [x_ref[n, row0:row0 + H, :] for n in range(NB)], axis=0)

    # Banded conv: one (NB*H, W*Cin) @ (W*Cin, W*Cout) MXU pass per kh tap,
    # f32 accumulator.  Result is already lane-dense -> no epilogue relayout.
    acc = jnp.dot(stack_rows(0), w_ref[0], preferred_element_type=jnp.float32)
    for kh in range(1, KH):
        acc = acc + jnp.dot(stack_rows(kh), w_ref[kh],
                            preferred_element_type=jnp.float32)

    z = acc + shift_ref[...]                                   # (NB*H, W*Cout)

    # SELU (exp gated so the discarded positive branch never produces inf).
    neg = SELU_ALPHA * (jnp.exp(jnp.minimum(z, 0.0)) - 1.0)
    y = SELU_LAMBDA * jnp.where(z > 0.0, z, neg)

    # Residual add: the unpadded interior rows of the same input block
    # (Cin == Cout, so the lane packing matches) -- no separate residual DMA.
    res = stack_rows(PH)
    out = (y + res).astype(o_ref.dtype)
    o_ref[...] = out.reshape(NB, H, WC_out)                    # unmasked vst


@functools.partial(jax.jit, static_argnames=("padding",))
def _residual_conv_bn_selu(x_nchw, weight_oihw, gamma, beta, running_mean,
                           running_var, padding=(1, 1), eps=1e-5):
    """fn(x) + x with fn = Conv2d(bias=False) -> BatchNorm2d(eval) -> SELU."""
    # ---- plain-JAX glue: layout, height-only pad, BN/band folding ----
    x = jnp.transpose(x_nchw, (0, 2, 3, 1)).astype(jnp.float32)       # NCHW->NHWC
    w = jnp.transpose(weight_oihw, (2, 3, 1, 0)).astype(jnp.float32)  # OIHW->HWIO

    N, H, W, Cin = x.shape
    KH, KW, _, Cout = w.shape
    ph, pw = padding
    assert Cin == Cout, "Residual add requires in_channels == out_channels"
    assert 2 * ph == KH - 1 and 2 * pw == KW - 1, "stride-1 'same' conv expected"
    # Lane-dense design requirement (otherwise masked partial stores reappear).
    assert (W * Cin) % 128 == 0 and (W * Cout) % 128 == 0

    scale = (gamma / jnp.sqrt(running_var + eps)).astype(jnp.float32)  # (Cout,)
    shift = (beta - running_mean * scale).astype(jnp.float32)          # (Cout,)
    w_folded = w * scale                                    # (KH, KW, Cin, Cout)

    # Banded weight: fold the kw shift, the channel mix and the width
    # zero-padding into one (W*Cin, W*Cout) block-banded matrix per kh tap:
    #   W_kh[w_in*Cin+ci, w_out*Cout+co] = w_folded[kh, w_in-w_out+pw, ci, co]
    #   if 0 <= w_in-w_out+pw < KW else 0.
    w_in = jnp.arange(W)[:, None]
    w_out = jnp.arange(W)[None, :]
    kw_idx = w_in - w_out + pw                               # (W, W)
    valid = ((kw_idx >= 0) & (kw_idx < KW)).astype(jnp.float32)
    kw_safe = jnp.clip(kw_idx, 0, KW - 1)
    banded = w_folded[:, kw_safe, :, :] * valid[None, :, :, None, None]
    w_banded = jnp.transpose(banded, (0, 1, 3, 2, 4)).reshape(
        KH, W * Cin, W * Cout)

    # Tile the shift lane-dense: element (w*Cout + co) == shift[co].
    shift_tiled = jnp.tile(shift, W).reshape(1, W * Cout)

    # Only the small height pad remains outside the kernel (width pad is folded
    # into w_banded); transpose/pad/reshape are adjacent so XLA can fuse them.
    Hp = H + 2 * ph
    x_padh = jnp.pad(x, ((0, 0), (ph, ph), (0, 0), (0, 0))).reshape(
        N, Hp, W * Cin)

    # Generation-conditional grid: one batch element per step on 2-TC chips
    # (v7x, "parallel" spreads steps over both TensorCores); single grid step
    # with batch folded into the matmul M dim on 1-TC chips (v5e/v6e).
    tc = _tensorcores_per_chip()
    nb = 1 if (tc > 1 and N % tc == 0) else N
    grid = (N // nb,)

    kernel = functools.partial(
        _residual_conv_bn_selu_kernel,
        KH=KH, PH=ph, H=H, W=W, Cin=Cin, Cout=Cout, NB=nb)

    out_flat = pl.pallas_call(
        kernel,
        out_shape=jax.ShapeDtypeStruct((N, H, W * Cout), jnp.float32),
        grid_spec=pltpu.PrefetchScalarGridSpec(
            num_scalar_prefetch=0,
            grid=grid,
            in_specs=[
                pl.BlockSpec((nb, Hp, W * Cin), lambda i: (i, 0, 0)),
                pl.BlockSpec((KH, W * Cin, W * Cout), lambda i: (0, 0, 0)),
                pl.BlockSpec((1, W * Cout), lambda i: (0, 0)),
            ],
            out_specs=pl.BlockSpec((nb, H, W * Cout), lambda i: (i, 0, 0)),
        ),
        compiler_params=pltpu.CompilerParams(
            dimension_semantics=("parallel",)),
    )(x_padh, w_banded, shift_tiled)

    out = out_flat.reshape(N, H, W, Cout)
    return jnp.transpose(out, (0, 3, 1, 2))                   # NHWC -> NCHW


def residual_forward(x, context, weight, gamma, beta, running_mean, running_var,
                     padding=(1, 1), eps=1e-5):
    """Residual.forward(x, context) = fn(x, context) + x (fn ignores context)."""
    del context  # TODO(synk): the fn instantiated here does not consume context.
    return _residual_conv_bn_selu(x, weight, gamma, beta, running_mean,
                                  running_var, padding=padding, eps=eps)


def _reference(x_nchw, weight_oihw, gamma, beta, running_mean, running_var,
               padding=(1, 1), eps=1e-5):
    """Pure-JAX reference: SELU(BN(conv(x))) + x."""
    x = jnp.transpose(x_nchw, (0, 2, 3, 1))
    w = jnp.transpose(weight_oihw, (2, 3, 1, 0))
    y = lax.conv_general_dilated(
        x, w, window_strides=(1, 1),
        padding=[(padding[0], padding[0]), (padding[1], padding[1])],
        dimension_numbers=("NHWC", "HWIO", "NHWC"))
    scale = gamma / jnp.sqrt(running_var + eps)
    shift = beta - running_mean * scale
    z = y * scale + shift
    selu = SELU_LAMBDA * jnp.where(
        z > 0.0, z, SELU_ALPHA * (jnp.exp(jnp.minimum(z, 0.0)) - 1.0))
    out = selu + x
    return jnp.transpose(out, (0, 3, 1, 2))


if __name__ == "__main__":
    # Residual(fn) with fn = Conv2d(in=8, out=8, k=3, stride=1, pad=1, bias=False)
    # -> BatchNorm2d(8, eval) -> SELU.  in==out channels so fn(x)+x is shape-valid;
    # W*C = 16*8 = 128 gives fully lane-dense activation layouts.
    N, C, H, W = 2, 8, 16, 16
    KH, KW = 3, 3

    key = jax.random.PRNGKey(0)
    kx, kw_, kg, kb, km, kv = jax.random.split(key, 6)

    x = jax.random.normal(kx, (N, C, H, W), dtype=jnp.float32)
    weight = jax.random.normal(kw_, (C, C, KH, KW), dtype=jnp.float32) * 0.1
    gamma = 1.0 + 0.1 * jax.random.normal(kg, (C,), dtype=jnp.float32)
    beta = 0.1 * jax.random.normal(kb, (C,), dtype=jnp.float32)
    running_mean = 0.1 * jax.random.normal(km, (C,), dtype=jnp.float32)
    running_var = jnp.abs(1.0 + 0.1 * jax.random.normal(kv, (C,), dtype=jnp.float32))

    out = residual_forward(x, None, weight, gamma, beta, running_mean,
                           running_var, padding=(1, 1))
    out = jax.block_until_ready(out)

    ref = _reference(x, weight, gamma, beta, running_mean, running_var,
                     padding=(1, 1))
    np.testing.assert_allclose(np.asarray(out), np.asarray(ref),
                               rtol=1e-4, atol=1e-4)

    print("KERNEL_OK")
</pallas_src>

<mosaic_0001>
module attributes {stable_mosaic.version = 11 : i64} {
  func.func @_residual_conv_bn_selu_kernel(%arg0: i32, %arg1: memref<2x18x128xf32, #tpu.memory_space<vmem>>, %arg2: memref<3x128x128xf32, #tpu.memory_space<vmem>>, %arg3: memref<1x128xf32, #tpu.memory_space<vmem>>, %arg4: memref<2x16x128xf32, #tpu.memory_space<vmem>>) attributes {dimension_semantics = [#tpu.dimension_semantics<parallel>], iteration_bounds = array<i64: 1>, scalar_prefetch = 0 : i64, scratch_operands = 0 : i64, tpu.core_type = #tpu.core_type<tc>, window_params = [{transform_indices = @transform_0, window_bounds = array<i64: 2, 18, 128>}, {pipeline_mode = #tpu.pipeline_mode<synchronous>, transform_indices = @transform_1, window_bounds = array<i64: 3, 128, 128>}, {pipeline_mode = #tpu.pipeline_mode<synchronous>, transform_indices = @transform_2, window_bounds = array<i64: 1, 128>}, {transform_indices = @transform_3, window_bounds = array<i64: 2, 16, 128>}]} {
    %c0 = arith.constant 0 : index
    %c0_0 = arith.constant 0 : index
    %c0_1 = arith.constant 0 : index
    %0 = vector.load %arg1[%c0, %c0_0, %c0_1] : memref<2x18x128xf32, #tpu.memory_space<vmem>>, vector<1x16x128xf32>
    %1 = vector.shape_cast %0 : vector<1x16x128xf32> to vector<16x128xf32>
    %c1 = arith.constant 1 : index
    %c0_2 = arith.constant 0 : index
    %c0_3 = arith.constant 0 : index
    %2 = vector.load %arg1[%c1, %c0_2, %c0_3] : memref<2x18x128xf32, #tpu.memory_space<vmem>>, vector<1x16x128xf32>
    %3 = vector.shape_cast %2 : vector<1x16x128xf32> to vector<16x128xf32>
    %4 = tpu.concatenate %1, %3 in 0 : vector<16x128xf32>, vector<16x128xf32> -> vector<32x128xf32>
    %c0_4 = arith.constant 0 : index
    %c0_5 = arith.constant 0 : index
    %c0_6 = arith.constant 0 : index
    %5 = vector.load %arg2[%c0_4, %c0_5, %c0_6] : memref<3x128x128xf32, #tpu.memory_space<vmem>>, vector<1x128x128xf32>
    %6 = vector.shape_cast %5 : vector<1x128x128xf32> to vector<128x128xf32>
    %cst = arith.constant dense<0.000000e+00> : vector<32x128xf32>
    %7 = tpu.matmul %4, %6, %cst {dimension_numbers = #tpu.dot_dimension_numbers<[1], [0], [0], [1], [0, 0, 1, 1], [], []>} : vector<32x128xf32>, vector<128x128xf32>, vector<32x128xf32> -> vector<32x128xf32>
    %c0_7 = arith.constant 0 : index
    %c1_8 = arith.constant 1 : index
    %c0_9 = arith.constant 0 : index
    %8 = vector.load %arg1[%c0_7, %c1_8, %c0_9] : memref<2x18x128xf32, #tpu.memory_space<vmem>>, vector<1x16x128xf32>
    %9 = vector.shape_cast %8 : vector<1x16x128xf32> to vector<16x128xf32>
    %c1_10 = arith.constant 1 : index
    %c1_11 = arith.constant 1 : index
    %c0_12 = arith.constant 0 : index
    %10 = vector.load %arg1[%c1_10, %c1_11, %c0_12] : memref<2x18x128xf32, #tpu.memory_space<vmem>>, vector<1x16x128xf32>
    %11 = vector.shape_cast %10 : vector<1x16x128xf32> to vector<16x128xf32>
    %12 = tpu.concatenate %9, %11 in 0 : vector<16x128xf32>, vector<16x128xf32> -> vector<32x128xf32>
    %c1_13 = arith.constant 1 : index
    %c0_14 = arith.constant 0 : index
    %c0_15 = arith.constant 0 : index
    %13 = vector.load %arg2[%c1_13, %c0_14, %c0_15] : memref<3x128x128xf32, #tpu.memory_space<vmem>>, vector<1x128x128xf32>
    %14 = vector.shape_cast %13 : vector<1x128x128xf32> to vector<128x128xf32>
    %cst_16 = arith.constant dense<0.000000e+00> : vector<32x128xf32>
    %15 = tpu.matmul %12, %14, %cst_16 {dimension_numbers = #tpu.dot_dimension_numbers<[1], [0], [0], [1], [0, 0, 1, 1], [], []>} : vector<32x128xf32>, vector<128x128xf32>, vector<32x128xf32> -> vector<32x128xf32>
    %16 = arith.addf %7, %15 : vector<32x128xf32>
    %c0_17 = arith.constant 0 : index
    %c2 = arith.constant 2 : index
    %c0_18 = arith.constant 0 : index
    %17 = vector.load %arg1[%c0_17, %c2, %c0_18] : memref<2x18x128xf32, #tpu.memory_space<vmem>>, vector<1x16x128xf32>
    %18 = vector.shape_cast %17 : vector<1x16x128xf32> to vector<16x128xf32>
    %c1_19 = arith.constant 1 : index
    %c2_20 = arith.constant 2 : index
    %c0_21 = arith.constant 0 : index
    %19 = vector.load %arg1[%c1_19, %c2_20, %c0_21] : memref<2x18x128xf32, #tpu.memory_space<vmem>>, vector<1x16x128xf32>
    %20 = vector.shape_cast %19 : vector<1x16x128xf32> to vector<16x128xf32>
    %21 = tpu.concatenate %18, %20 in 0 : vector<16x128xf32>, vector<16x128xf32> -> vector<32x128xf32>
    %c2_22 = arith.constant 2 : index
    %c0_23 = arith.constant 0 : index
    %c0_24 = arith.constant 0 : index
    %22 = vector.load %arg2[%c2_22, %c0_23, %c0_24] : memref<3x128x128xf32, #tpu.memory_space<vmem>>, vector<1x128x128xf32>
    %23 = vector.shape_cast %22 : vector<1x128x128xf32> to vector<128x128xf32>
    %cst_25 = arith.constant dense<0.000000e+00> : vector<32x128xf32>
    %24 = tpu.matmul %21, %23, %cst_25 {dimension_numbers = #tpu.dot_dimension_numbers<[1], [0], [0], [1], [0, 0, 1, 1], [], []>} : vector<32x128xf32>, vector<128x128xf32>, vector<32x128xf32> -> vector<32x128xf32>
    %25 = arith.addf %16, %24 : vector<32x128xf32>
    %c0_26 = arith.constant 0 : index
    %c0_27 = arith.constant 0 : index
    %26 = vector.load %arg3[%c0_26, %c0_27] : memref<1x128xf32, #tpu.memory_space<vmem>>, vector<1x128xf32>
    %27 = vector.broadcast %26 : vector<1x128xf32> to vector<32x128xf32>
    %28 = arith.addf %25, %27 : vector<32x128xf32>
    %cst_28 = arith.constant 0.000000e+00 : f32
    %29 = vector.broadcast %cst_28 : f32 to vector<32x128xf32>
    %30 = arith.minimumf %28, %29 : vector<32x128xf32>
    %31 = math.exp %30 : vector<32x128xf32>
    %cst_29 = arith.constant 1.000000e+00 : f32
    %32 = vector.broadcast %cst_29 : f32 to vector<32x128xf32>
    %33 = arith.subf %31, %32 : vector<32x128xf32>
    %cst_30 = arith.constant 1.67326319 : f32
    %34 = vector.broadcast %cst_30 : f32 to vector<32x128xf32>
    %35 = arith.mulf %34, %33 : vector<32x128xf32>
    %cst_31 = arith.constant 0.000000e+00 : f32
    %36 = vector.broadcast %cst_31 : f32 to vector<32x128xf32>
    %37 = arith.cmpf ogt, %28, %36 : vector<32x128xf32>
    %38 = arith.select %37, %28, %35 : vector<32x128xi1>, vector<32x128xf32>
    %cst_32 = arith.constant 1.05070102 : f32
    %39 = vector.broadcast %cst_32 : f32 to vector<32x128xf32>
    %40 = arith.mulf %39, %38 : vector<32x128xf32>
    %c0_33 = arith.constant 0 : index
    %c1_34 = arith.constant 1 : index
    %c0_35 = arith.constant 0 : index
    %41 = vector.load %arg1[%c0_33, %c1_34, %c0_35] : memref<2x18x128xf32, #tpu.memory_space<vmem>>, vector<1x16x128xf32>
    %42 = vector.shape_cast %41 : vector<1x16x128xf32> to vector<16x128xf32>
    %c1_36 = arith.constant 1 : index
    %c1_37 = arith.constant 1 : index
    %c0_38 = arith.constant 0 : index
    %43 = vector.load %arg1[%c1_36, %c1_37, %c0_38] : memref<2x18x128xf32, #tpu.memory_space<vmem>>, vector<1x16x128xf32>
    %44 = vector.shape_cast %43 : vector<1x16x128xf32> to vector<16x128xf32>
    %45 = tpu.concatenate %42, %44 in 0 : vector<16x128xf32>, vector<16x128xf32> -> vector<32x128xf32>
    %46 = arith.addf %40, %45 : vector<32x128xf32>
    %47 = vector.shape_cast %46 : vector<32x128xf32> to vector<2x16x128xf32>
    %c0_39 = arith.constant 0 : index
    %c0_40 = arith.constant 0 : index
    %c0_41 = arith.constant 0 : index
    %48 = vector.load %arg4[%c0_39, %c0_40, %c0_41] : memref<2x16x128xf32, #tpu.memory_space<vmem>>, vector<2x16x128xf32>
    tpu.vector_store %arg4[%c0_39, %c0_40, %c0_41], %47 {strides = array<i32>} : memref<2x16x128xf32, #tpu.memory_space<vmem>>, vector<2x16x128xf32>,
    return
  }
  func.func @transform_0(%arg0: i32) -> (i32, i32, i32) {
    %c0_i32 = arith.constant 0 : i32
    %c0_i32_0 = arith.constant 0 : i32
    %c0_i32_1 = arith.constant 0 : i32
    return %arg0, %c0_i32, %c0_i32_0 : i32, i32, i32
  }
  func.func @transform_1(%arg0: i32) -> (i32, i32, i32) {
    %c0_i32 = arith.constant 0 : i32
    %c0_i32_0 = arith.constant 0 : i32
    %c0_i32_1 = arith.constant 0 : i32
    %c0_i32_2 = arith.constant 0 : i32
    return %c0_i32, %c0_i32_0, %c0_i32_1 : i32, i32, i32
  }
  func.func @transform_2(%arg0: i32) -> (i32, i32) {
    %c0_i32 = arith.constant 0 : i32
    %c0_i32_0 = arith.constant 0 : i32
    %c0_i32_1 = arith.constant 0 : i32
    return %c0_i32, %c0_i32_0 : i32, i32
  }
  func.func @transform_3(%arg0: i32) -> (i32, i32, i32) {
    %c0_i32 = arith.constant 0 : i32
    %c0_i32_0 = arith.constant 0 : i32
    %c0_i32_1 = arith.constant 0 : i32
    return %arg0, %c0_i32, %c0_i32_0 : i32, i32, i32
  }
}

</mosaic_0001>

<llo_original>
// kernel: tile.8
$region0: #{tile.8}
  #allocation0 [shape = 's32[1]{0}', space=sflag, size = 0x4, scoped, tag = 'scoped memory for tile.8']
  %s0 = inlined_call_operand.vmem [shape: f32[8], index: 0, kind: input, shape index: {}]
  %s1 = inlined_call_operand.vmem [shape: f32[16,8], index: 1, kind: output, shape index: {}]
  // Predicated region
  $region2: #{tile.8} parent=0 // pred_check
    _
  $region3: #{tile.8} parent=0 // pred_check_branch
    %3 = sbr.rel (0) target = $region5
  $region4: #{tile.8} parent=0 // pred_region
    _
  $region5: #{tile.8} parent=0 // pred_fallthru
    _
  %v4 = vld [vmem:[%s0] ss:$0 sm:$0xff]
  %5 = vst [vmem:[%s1] sm:$0xff] %v4
  %s6 = scalar_lea.vmem %s1, 8
  %7 = vst [vmem:[%s6] sm:$0xff] %v4

// kernel: tile.9
$region0: #{tile.9}
  %s0 = inlined_call_operand.vmem [shape: f32[16,8], index: 0, kind: input, shape index: {}]
  %s1 = inlined_call_operand.vmem [shape: f32[1,128], index: 1, kind: output, shape index: {}]
  $region1: #{tile.9} parent=0
    #allocation0 [shape = 'u8[4096]{0}', space=vmem, size = 0x1000, scoped, tag = 'scoped mem for output reshape']
    %v2 = vld [vmem:[%s0] sm:$0x1]
    %vm3 = vcmask 64512
    %4 = vst.msk [vmem:[#allocation0] sm:$0x1] %vm3, %v2
    %s5 = scalar_lea.vmem %s0, 15
    %v6 = vld [vmem:[%s5] sm:$0x1]
    %7 = vrot.lane.b32.xlu0 %v6, 120
    %v8 = vpop.permute.xlu0 %7
    %vm9 = vcmask 1048512
    %10 = vst.msk [vmem:[#allocation0] sm:$0x1] %vm9, %v8
    %s11 = scalar_lea.vmem %s0, 14
    %v12 = vld [vmem:[%s11] sm:$0x1]
    %13 = vrot.lane.b32.xlu0 %v12, 112
    %v14 = vpop.permute.xlu0 %13
    %vm15 = vcmask 982912
    %16 = vst.msk [vmem:[#allocation0] sm:$0x1] %vm15, %v14
    %s17 = scalar_lea.vmem %s0, 13
    %v18 = vld [vmem:[%s17] sm:$0x1]
    %19 = vrot.lane.b32.xlu0 %v18, 104
    %v20 = vpop.permute.xlu0 %19
    %vm21 = vcmask 917312
    %22 = vst.msk [vmem:[#allocation0] sm:$0x1] %vm21, %v20
    %s23 = scalar_lea.vmem %s0, 12
    %v24 = vld [vmem:[%s23] sm:$0x1]
    %25 = vrot.lane.b32.xlu0 %v24, 96
    %v26 = vpop.permute.xlu0 %25
    %vm27 = vcmask 851712
    %28 = vst.msk [vmem:[#allocation0] sm:$0x1] %vm27, %v26
    %s29 = scalar_lea.vmem %s0, 11
    %v30 = vld [vmem:[%s29] sm:$0x1]
    %31 = vrot.lane.b32.xlu0 %v30, 88
    %v32 = vpop.permute.xlu0 %31
    %vm33 = vcmask 786112
    %34 = vst.msk [vmem:[#allocation0] sm:$0x1] %vm33, %v32
    %s35 = scalar_lea.vmem %s0, 10
    %v36 = vld [vmem:[%s35] sm:$0x1]
    %37 = vrot.lane.b32.xlu0 %v36, 80
    %v38 = vpop.permute.xlu0 %37
    %vm39 = vcmask 720512
    %40 = vst.msk [vmem:[#allocation0] sm:$0x1] %vm39, %v38
    %s41 = scalar_lea.vmem %s0, 9
    %v42 = vld [vmem:[%s41] sm:$0x1]
    %43 = vrot.lane.b32.xlu0 %v42, 72
    %v44 = vpop.permute.xlu0 %43
    %vm45 = vcmask 654912
    %46 = vst.msk [vmem:[#allocation0] sm:$0x1] %vm45, %v44
    %s47 = scalar_lea.vmem %s0, 8
    %v48 = vld [vmem:[%s47] sm:$0x1]
    %49 = vrot.lane.b32.xlu0 %v48, 64
    %v50 = vpop.permute.xlu0 %49
    %vm51 = vcmask 589312
    %52 = vst.msk [vmem:[#allocation0] sm:$0x1] %vm51, %v50
    %s53 = scalar_lea.vmem %s0, 7
    %v54 = vld [vmem:[%s53] sm:$0x1]
    %55 = vrot.lane.b32.xlu0 %v54, 56
    %v56 = vpop.permute.xlu0 %55
    %vm57 = vcmask 523712
    %58 = vst.msk [vmem:[#allocation0] sm:$0x1] %vm57, %v56
    %s59 = scalar_lea.vmem %s0, 6
    %v60 = vld [vmem:[%s59] sm:$0x1]
    %61 = vrot.lane.b32.xlu0 %v60, 48
    %v62 = vpop.permute.xlu0 %61
    %vm63 = vcmask 458112
    %64 = vst.msk [vmem:[#allocation0] sm:$0x1] %vm63, %v62
    %s65 = scalar_lea.vmem %s0, 5
    %v66 = vld [vmem:[%s65] sm:$0x1]
    %67 = vrot.lane.b32.xlu0 %v66, 40
    %v68 = vpop.permute.xlu0 %67
    %vm69 = vcmask 392512
    %70 = vst.msk [vmem:[#allocation0] sm:$0x1] %vm69, %v68
    %s71 = scalar_lea.vmem %s0, 4
    %v72 = vld [vmem:[%s71] sm:$0x1]
    %73 = vrot.lane.b32.xlu0 %v72, 32
    %v74 = vpop.permute.xlu0 %73
    %vm75 = vcmask 326912
    %76 = vst.msk [vmem:[#allocation0] sm:$0x1] %vm75, %v74
    %s77 = scalar_lea.vmem %s0, 3
    %v78 = vld [vmem:[%s77] sm:$0x1]
    %79 = vrot.lane.b32.xlu0 %v78, 24
    %v80 = vpop.permute.xlu0 %79
    %vm81 = vcmask 261312
    %82 = vst.msk [vmem:[#allocation0] sm:$0x1] %vm81, %v80
    %s83 = scalar_lea.vmem %s0, 2
    %v84 = vld [vmem:[%s83] sm:$0x1]
    %85 = vrot.lane.b32.xlu0 %v84, 16
    %v86 = vpop.permute.xlu0 %85
    %vm87 = vcmask 195712
    %88 = vst.msk [vmem:[#allocation0] sm:$0x1] %vm87, %v86
    %s89 = scalar_lea.vmem %s0, 1
    %v90 = vld [vmem:[%s89] sm:$0x1]
    %91 = vrot.lane.b32.xlu0 %v90, 8
    %v92 = vpop.permute.xlu0 %91
    %vm93 = vcmask 130112
    %94 = vst.msk [vmem:[#allocation0] sm:$0x1] %vm93, %v92
    %s96 = ssub.s32 2, 1
    %v97 = vld [vmem:[#allocation0] sm:%s96]
    %s99 = ssub.s32 2, 1
    %100 = vst [vmem:[%s1] sm:%s99] %v97

// kernel: _residual_conv_bn_selu.1
$region0: #{_residual_conv_bn_selu.1}
  #allocation0 [shape = 'u32[]', space=smem, size = 0x4, offset = 0x4, fixed_abs, tag = 'smem constant byte address 0x4 - core index']
  #allocation1 [shape = 'u32[72,128]{1,0:T(1,128)}', space=vmem, size = 0x9000, scoped, tag = 'internal scratch']
  %s0 = inlined_call_operand.vmem [shape: f32[2,18,128], index: 0, kind: input, shape index: {}]
  %s1 = inlined_call_operand.vmem [shape: f32[3,128,128], index: 1, kind: input, shape index: {}]
  %s2 = inlined_call_operand.vmem [shape: f32[1,128], index: 2, kind: input, shape index: {}]
  %s3 = inlined_call_operand.vmem [shape: f32[2,16,128], index: 3, kind: output, shape index: {}]
  %s4 = sld [smem:[#allocation0]]
  $region22: #{_residual_conv_bn_selu.1} parent=0
    _
  %s6 = ssub.s32 1, %s4
  %s7 = scalar_select 0, %s6, %s4
  // Predicated region
  $region2: #{_residual_conv_bn_selu.1} parent=0 // pred_check
    _
  $region3: #{_residual_conv_bn_selu.1} parent=0 // pred_check_branch
    %9 = sbr.rel (0) target = $region5
  $region4: #{_residual_conv_bn_selu.1} parent=0 // pred_region
    _
  $region5: #{_residual_conv_bn_selu.1} parent=0 // pred_fallthru
    _
  // Predicated region
  $region6: #{_residual_conv_bn_selu.1} parent=0 // pred_check
    _
  $region7: #{_residual_conv_bn_selu.1} parent=0 // pred_check_branch
    %11 = sbr.rel (0) target = $region9
  $region8: #{_residual_conv_bn_selu.1} parent=0 // pred_region
    _
  $region9: #{_residual_conv_bn_selu.1} parent=0 // pred_fallthru
    _
  // Predicated region
  $region10: #{_residual_conv_bn_selu.1} parent=0 // pred_check
    _
  $region11: #{_residual_conv_bn_selu.1} parent=0 // pred_check_branch
    %13 = sbr.rel (0) target = $region13
  $region12: #{_residual_conv_bn_selu.1} parent=0 // pred_region
    _
  $region13: #{_residual_conv_bn_selu.1} parent=0 // pred_fallthru
    _
  %v14 = vld [vmem:[%s0] sm:$0xff]
  %v15 = vld [vmem:[%s0 + $0x8] sm:$0xff]
  %s16 = scalar_lea.vmem %s0, 24
  %v17 = vld [vmem:[%s16] sm:$0xff]
  %v18 = vld [vmem:[%s16 + $0x8] sm:$0xff]
  %v19 = vld [vmem:[%s1] sm:$0xff]
  %v20 = vld [vmem:[%s1 + $0x8] sm:$0xff]
  %v21 = vld [vmem:[%s1 + $0x10] sm:$0xff]
  %v22 = vld [vmem:[%s1 + $0x18] sm:$0xff]
  %v23 = vld [vmem:[%s1 + $0x20] sm:$0xff]
  %v24 = vld [vmem:[%s1 + $0x28] sm:$0xff]
  %v25 = vld [vmem:[%s1 + $0x30] sm:$0xff]
  %v26 = vld [vmem:[%s1 + $0x38] sm:$0xff]
  %v27 = vld [vmem:[%s1 + $0x40] sm:$0xff]
  %v28 = vld [vmem:[%s1 + $0x48] sm:$0xff]
  %v29 = vld [vmem:[%s1 + $0x50] sm:$0xff]
  %v30 = vld [vmem:[%s1 + $0x58] sm:$0xff]
  %v31 = vld [vmem:[%s1 + $0x60] sm:$0xff]
  %v32 = vld [vmem:[%s1 + $0x68] sm:$0xff]
  %v33 = vld [vmem:[%s1 + $0x70] sm:$0xff]
  %v34 = vld [vmem:[%s1 + $0x78] sm:$0xff]
  %v35 = vld [vmem:[%s0 + $0x1] sm:$0xff]
  %v36 = vld [vmem:[%s0 + $0x9] sm:$0xff]
  %v37 = vld [vmem:[%s16 + $0x1] sm:$0xff]
  %v38 = vld [vmem:[%s16 + $0x9] sm:$0xff]
  %s39 = scalar_lea.vmem %s1, 128
  %v40 = vld [vmem:[%s39] sm:$0xff]
  %v41 = vld [vmem:[%s39 + $0x8] sm:$0xff]
  %v42 = vld [vmem:[%s39 + $0x10] sm:$0xff]
  %v43 = vld [vmem:[%s39 + $0x18] sm:$0xff]
  %v44 = vld [vmem:[%s39 + $0x20] sm:$0xff]
  %v45 = vld [vmem:[%s39 + $0x28] sm:$0xff]
  %v46 = vld [vmem:[%s39 + $0x30] sm:$0xff]
  %v47 = vld [vmem:[%s39 + $0x38] sm:$0xff]
  %v48 = vld [vmem:[%s39 + $0x40] sm:$0xff]
  %v49 = vld [vmem:[%s39 + $0x48] sm:$0xff]
  %v50 = vld [vmem:[%s39 + $0x50] sm:$0xff]
  %v51 = vld [vmem:[%s39 + $0x58] sm:$0xff]
  %v52 = vld [vmem:[%s39 + $0x60] sm:$0xff]
  %v53 = vld [vmem:[%s39 + $0x68] sm:$0xff]
  %v54 = vld [vmem:[%s39 + $0x70] sm:$0xff]
  %v55 = vld [vmem:[%s39 + $0x78] sm:$0xff]
  %56 = vmatpush.msra.mxu0 %v55
  %57 = vmatpush.msra.mxu0 %v54
  %58 = vmatpush.msra.mxu0 %v53
  %59 = vmatpush.msra.mxu0 %v52
  %60 = vmatpush.msra.mxu0 %v51
  %61 = vmatpush.msra.mxu0 %v50
  %62 = vmatpush.msra.mxu0 %v49
  %63 = vmatpush.msra.mxu0 %v48
  %64 = vmatpush.msra.mxu0 %v47
  %65 = vmatpush.msra.mxu0 %v46
  %66 = vmatpush.msra.mxu0 %v45
  %67 = vmatpush.msra.mxu0 %v44
  %68 = vmatpush.msra.mxu0 %v43
  %69 = vmatpush.msra.mxu0 %v42
  %70 = vmatpush.msra.mxu0 %v41
  %71 = vmatpush.msra.mxu0 %v40
  %72 = vmatmul.f32.gmra.mxu0 %v35
  %v73 = vpop.f32.mrf.mxu0
  %v74 = vadd.f32 0.0, %v73
  %75 = vmatmul.f32.gmra.mxu0 %v36
  %v76 = vpop.f32.mrf.mxu0
  %v77 = vadd.f32 0.0, %v76
  %78 = vmatmul.f32.gmra.mxu0 %v37
  %v79 = vpop.f32.mrf.mxu0
  %v80 = vadd.f32 0.0, %v79
  %81 = vmatmul.f32.gmra.mxu0 %v38
  %v82 = vpop.f32.mrf.mxu0
  %v83 = vadd.f32 0.0, %v82
  %84 = vdwg.mxu0
  %85 = vmatpush.msra.mxu0 %v34
  %86 = vmatpush.msra.mxu0 %v33
  %87 = vmatpush.msra.mxu0 %v32
  %88 = vmatpush.msra.mxu0 %v31
  %89 = vmatpush.msra.mxu0 %v30
  %90 = vmatpush.msra.mxu0 %v29
  %91 = vmatpush.msra.mxu0 %v28
  %92 = vmatpush.msra.mxu0 %v27
  %93 = vmatpush.msra.mxu0 %v26
  %94 = vmatpush.msra.mxu0 %v25
  %95 = vmatpush.msra.mxu0 %v24
  %96 = vmatpush.msra.mxu0 %v23
  %97 = vmatpush.msra.mxu0 %v22
  %98 = vmatpush.msra.mxu0 %v21
  %99 = vmatpush.msra.mxu0 %v20
  %100 = vmatpush.msra.mxu0 %v19
  %101 = vmatmul.f32.gmra.mxu0 %v14
  %v102 = vpop.f32.mrf.mxu0
  %v103 = vadd.f32 %v74, %v102
  %104 = vmatmul.f32.gmra.mxu0 %v15
  %v105 = vpop.f32.mrf.mxu0
  %v106 = vadd.f32 %v77, %v105
  %107 = vmatmul.f32.gmra.mxu0 %v17
  %v108 = vpop.f32.mrf.mxu0
  %v109 = vadd.f32 %v80, %v108
  %110 = vmatmul.f32.gmra.mxu0 %v18
  %v111 = vpop.f32.mrf.mxu0
  %v112 = vadd.f32 %v83, %v111
  %113 = vdwg.mxu0
  %v114 = vld [vmem:[%s0 + $0x2] sm:$0xff]
  %v115 = vld [vmem:[%s0 + $0xa] sm:$0xff]
  %v116 = vld [vmem:[%s16 + $0x2] sm:$0xff]
  %v117 = vld [vmem:[%s16 + $0xa] sm:$0xff]
  %s118 = scalar_lea.vmem %s1, 256
  %v119 = vld [vmem:[%s118] sm:$0xff]
  %v120 = vld [vmem:[%s118 + $0x8] sm:$0xff]
  %v121 = vld [vmem:[%s118 + $0x10] sm:$0xff]
  %v122 = vld [vmem:[%s118 + $0x18] sm:$0xff]
  %v123 = vld [vmem:[%s118 + $0x20] sm:$0xff]
  %v124 = vld [vmem:[%s118 + $0x28] sm:$0xff]
  %v125 = vld [vmem:[%s118 + $0x30] sm:$0xff]
  %v126 = vld [vmem:[%s118 + $0x38] sm:$0xff]
  %v127 = vld [vmem:[%s118 + $0x40] sm:$0xff]
  %v128 = vld [vmem:[%s118 + $0x48] sm:$0xff]
  %v129 = vld [vmem:[%s118 + $0x50] sm:$0xff]
  %v130 = vld [vmem:[%s118 + $0x58] sm:$0xff]
  %v131 = vld [vmem:[%s118 + $0x60] sm:$0xff]
  %v132 = vld [vmem:[%s118 + $0x68] sm:$0xff]
  %v133 = vld [vmem:[%s118 + $0x70] sm:$0xff]
  %v134 = vld [vmem:[%s118 + $0x78] sm:$0xff]
  %135 = vmatpush.msra.mxu0 %v134
  %136 = vmatpush.msra.mxu0 %v133
  %137 = vmatpush.msra.mxu0 %v132
  %138 = vmatpush.msra.mxu0 %v131
  %139 = vmatpush.msra.mxu0 %v130
  %140 = vmatpush.msra.mxu0 %v129
  %141 = vmatpush.msra.mxu0 %v128
  %142 = vmatpush.msra.mxu0 %v127
  %143 = vmatpush.msra.mxu0 %v126
  %144 = vmatpush.msra.mxu0 %v125
  %145 = vmatpush.msra.mxu0 %v124
  %146 = vmatpush.msra.mxu0 %v123
  %147 = vmatpush.msra.mxu0 %v122
  %148 = vmatpush.msra.mxu0 %v121
  %149 = vmatpush.msra.mxu0 %v120
  %150 = vmatpush.msra.mxu0 %v119
  %151 = vmatmul.f32.gmra.mxu0 %v114
  %v152 = vpop.f32.mrf.mxu0
  %v153 = vadd.f32 0.0, %v152
  %154 = vmatmul.f32.gmra.mxu0 %v115
  %v155 = vpop.f32.mrf.mxu0
  %v156 = vadd.f32 0.0, %v155
  %157 = vmatmul.f32.gmra.mxu0 %v116
  %v158 = vpop.f32.mrf.mxu0
  %v159 = vadd.f32 0.0, %v158
  %160 = vmatmul.f32.gmra.mxu0 %v117
  %v161 = vpop.f32.mrf.mxu0
  %v162 = vadd.f32 0.0, %v161
  %163 = vdwg.mxu0
  %v164 = vadd.f32 %v103, %v153
  %v165 = vadd.f32 %v106, %v156
  %v166 = vadd.f32 %v109, %v159
  %v167 = vadd.f32 %v112, %v162
  %v168 = vld [vmem:[%s2] sm:$0x1]
  %v170 = vperm.slane %v168, 0
  %v172 = vadd.f32 %v164, %v170
  %v173 = vadd.f32 %v165, %v170
  %v174 = vadd.f32 %v166, %v170
  %v175 = vadd.f32 %v167, %v170
  %v176 = vmin.f32 %v172, 0.0
  %v177 = vmin.f32 %v173, 0.0
  %v178 = vmin.f32 %v174, 0.0
  %v179 = vmin.f32 %v175, 0.0
  %v180 = vmul.f32 %v176, 1.442695
  %v181 = vpow.pop %v180
  %v182 = vmul.f32 %v177, 1.442695
  %v183 = vpow.pop %v182
  %v184 = vmul.f32 %v178, 1.442695
  %v185 = vpow.pop %v184
  %v186 = vmul.f32 %v179, 1.442695
  %v187 = vpow.pop %v186
  %v188 = vsub.f32 %v181, 1.0
  %v189 = vsub.f32 %v183, 1.0
  %v190 = vsub.f32 %v185, 1.0
  %v191 = vsub.f32 %v187, 1.0
  %v192 = vmul.f32 %v188, 1.6732632
  %v193 = vmul.f32 %v189, 1.6732632
  %v194 = vmul.f32 %v190, 1.6732632
  %v195 = vmul.f32 %v191, 1.6732632
  %vm196 = vcmp.gt.f32.partialorder %v172, 0.0
  %vm197 = vcmp.gt.f32.partialorder %v173, 0.0
  %vm198 = vcmp.gt.f32.partialorder %v174, 0.0
  %vm199 = vcmp.gt.f32.partialorder %v175, 0.0
  %v200 = vsel %vm196, %v172, %v192
  %v201 = vsel %vm197, %v173, %v193
  %v202 = vsel %vm198, %v174, %v194
  %v203 = vsel %vm199, %v175, %v195
  %v204 = vmul.f32 %v200, 1.050701
  %v205 = vmul.f32 %v201, 1.050701
  %v206 = vmul.f32 %v202, 1.050701
  %v207 = vmul.f32 %v203, 1.050701
  %v208 = vadd.f32 %v204, %v35
  %v209 = vadd.f32 %v205, %v36
  %v210 = vadd.f32 %v206, %v37
  %v211 = vadd.f32 %v207, %v38
  %212 = vst [vmem:[%s3] sm:$0xff] %v208
  %213 = vst [vmem:[%s3 + $0x8] sm:$0xff] %v209
  %214 = vst [vmem:[%s3 + $0x10] sm:$0xff] %v210
  %215 = vst [vmem:[%s3 + $0x18] sm:$0xff] %v211
  // Predicated region
  $region14: #{_residual_conv_bn_selu.1} parent=0 // pred_check
    _
  $region15: #{_residual_conv_bn_selu.1} parent=0 // pred_check_branch
    %217 = sbr.rel (0) target = $region17
  $region16: #{_residual_conv_bn_selu.1} parent=0 // pred_region
    _
  $region17: #{_residual_conv_bn_selu.1} parent=0 // pred_fallthru
    _
  // Predicated region
  $region18: #{_residual_conv_bn_selu.1} parent=0 // pred_check
    _
  $region19: #{_residual_conv_bn_selu.1} parent=0 // pred_check_branch
    %219 = sbr.rel (0) target = $region21
  $region20: #{_residual_conv_bn_selu.1} parent=0 // pred_region
    _
  $region21: #{_residual_conv_bn_selu.1} parent=0 // pred_fallthru
    _

</llo_original>
